<compile_context>
chip_gen: v7x
topology: tpu7x:2x2x1
jax: 0.10.0
libtpu: 0.0.40
codegen_flags: <defaults>
</compile_context>

<pallas_src>
import functools
import math

import jax
import jax.numpy as jnp
from jax import lax
from jax.experimental import pallas as pl
from jax.experimental.pallas import tpu as pltpu


# --------------------------------------------------------------------------
# Pallas kernel: fused ConvTranspose2d + InstanceNorm2d + ReLU (one sample)
# --------------------------------------------------------------------------
def _upconv_in_relu_kernel(x_ref, w_ref, col_ref, o_ref, *,
                           kh, kw, stride, padding,
                           c_out, h_in, w_in, h_cls,
                           eps, apply_relu):
    # x_ref:   (1, C_in, H*W)           bf16 input sample, spatial flattened
    # w_ref:   (kh*kw*C_out, C_in)      bf16 stacked per-tap weights
    # col_ref: (1, H*W) int32           column index (q mod W) per flat pos
    # o_ref:   (1, s*s*C_out, H_cls*W)  f32 parity-class-decomposed output
    s = stride
    ss = s * s
    p_in = h_in * w_in
    p_cls = h_cls * w_in

    # ---- transposed conv: one MXU matmul covering all kh*kw taps -----------
    # (kh*kw*C_out, C_in) @ (C_in, H*W) -> (kh*kw*C_out, H*W), lane-dense.
    y_all = jnp.dot(w_ref[...], x_ref[0], preferred_element_type=jnp.float32)
    col = col_ref[...]                                    # (1, p_in) int32

    # ---- scatter-accumulate each tap into its output parity class ----------
    # ConvTranspose scatter rule: x[yi, xi] * w[r, c] -> out[s*yi - p + r,
    # s*xi - p + c].  With yo = s*m + py, the tap (r, c) feeds parity class
    # (py, px) at a constant flat-lane shift (static Python bookkeeping only).
    o_ref[...] = jnp.zeros_like(o_ref)
    for r in range(kh):
        oy, py = divmod(r - padding, s)                   # floor div / mod
        yi_lo, yi_hi = max(0, -oy), min(h_in, h_cls - oy)
        if yi_lo >= yi_hi:
            continue
        for c in range(kw):
            ox, px = divmod(c - padding, s)
            xi_lo, xi_hi = max(0, -ox), min(w_in, w_in - ox)
            if xi_lo >= xi_hi:
                continue
            t = r * kw + c
            cls = py * s + px
            shift = oy * w_in + ox                        # flat lane shift

            src_lo, src_hi = yi_lo * w_in, yi_hi * w_in
            dst_lo, dst_hi = src_lo + shift, src_hi + shift
            cut_lo = max(0, -dst_lo)                      # clamp to [0, p_cls)
            cut_hi = max(0, dst_hi - p_cls)               # (drops masked-only)
            src_lo, dst_lo = src_lo + cut_lo, dst_lo + cut_lo
            src_hi, dst_hi = src_hi - cut_hi, dst_hi - cut_hi
            if src_lo >= src_hi:
                continue

            seg = y_all[t * c_out:(t + 1) * c_out, src_lo:src_hi]
            if ox != 0:
                # kill columns that would wrap across the row boundary
                m = (col >= xi_lo) & (col < xi_hi)        # (1, p_in)
                seg = jnp.where(m[:, src_lo:src_hi], seg, 0.0)
            o_ref[0, cls * c_out:(cls + 1) * c_out, dst_lo:dst_hi] += seg

    # ---- InstanceNorm2d (affine=False) over all spatial positions + ReLU ---
    y = o_ref[0].reshape(ss, c_out, p_cls)                # minor dim unchanged
    inv_n = 1.0 / float(ss * p_cls)                       # = 1 / (H_out*W_out)
    mean = jnp.sum(jnp.sum(y, axis=2, keepdims=True),
                   axis=0, keepdims=True) * inv_n          # (1, C_out, 1)
    d = y - mean
    var = jnp.sum(jnp.sum(d * d, axis=2, keepdims=True),
                  axis=0, keepdims=True) * inv_n
    out = d * lax.rsqrt(var + eps)
    if apply_relu:
        out = jnp.maximum(out, 0.0)
    o_ref[0] = out.reshape(ss * c_out, p_cls).astype(o_ref.dtype)


# --------------------------------------------------------------------------
# Wrapper
# --------------------------------------------------------------------------
def upsampling_conv_block(x, weight, bias=None, *, stride, padding,
                          output_padding, apply_activation=True, eps=1e-5,
                          compute_dtype=jnp.bfloat16):
    """Forward pass of _UpSamplingConvolutionalBlock.

    x:      (N, C_in, H, W)         NCHW float32
    weight: (C_in, C_out, kh, kw)   torch ConvTranspose2d weight layout
    bias:   (C_out,)                mathematically cancelled by InstanceNorm
    """
    N, C_in, H, W = x.shape
    wc_in, C_out, kh, kw = weight.shape
    assert wc_in == C_in
    s = int(stride)

    H_out = (H - 1) * s - 2 * padding + kh + output_padding
    W_out = (W - 1) * s - 2 * padding + kw + output_padding

    # Parity (sub-pixel) decomposition geometry used by the kernel: every one
    # of the s*s output parity classes is a full (H_out/s, W) sub-grid.  Holds
    # for any "scale-by-s" ConvTranspose2d (k + output_padding == 2*padding+s),
    # in particular the CycleGAN config k=3, s=2, p=1, op=1.
    assert H_out % s == 0 and W_out == s * W, (
        "unsupported ConvTranspose2d geometry for this Pallas kernel")
    # TODO(synk): generalize to ragged parity classes (W_out != stride * W).

    H_cls = H_out // s
    ss = s * s
    P_in = H * W
    P_cls = H_cls * W
    KT = kh * kw * C_out

    # ConvTranspose2d bias is a per-channel constant -> InstanceNorm2d
    # (affine=False) removes it exactly; do not ship it to the kernel.
    del bias

    # Matmul operands in bf16 (MXU rate, half the input DMA bytes); f32 accum.
    x_flat = x.reshape(N, C_in, P_in).astype(compute_dtype)
    # W_all[(r*kw + c)*C_out + co, ci] = weight[ci, co, r, c]
    w_all = jnp.transpose(weight, (2, 3, 1, 0)).reshape(KT, C_in)
    w_all = w_all.astype(compute_dtype)
    col_idx = (jnp.arange(P_in, dtype=jnp.int32) % W).reshape(1, P_in)

    kernel = functools.partial(
        _upconv_in_relu_kernel, kh=kh, kw=kw, stride=s, padding=padding,
        c_out=C_out, h_in=H, w_in=W, h_cls=H_cls, eps=eps,
        apply_relu=apply_activation)

    # Per-grid-step VMEM estimate (double-buffered I/O blocks + temporaries).
    isz = jnp.dtype(compute_dtype).itemsize
    est = (2 * (C_in * P_in * isz + P_in * 4 + KT * C_in * isz
                + ss * C_out * P_cls * 4)
           + 2 * KT * P_in * 4)
    assert est <= 40 * 1024 * 1024, (
        "per-sample working set too large for VMEM; "
        "TODO(synk): spatial tiling with cross-tile InstanceNorm stats")
    vmem_limit = int(min(max(est * 3 // 2, 32 * 1024 * 1024),
                         64 * 1024 * 1024))               # v7x-safe cap

    cost = pl.CostEstimate(
        flops=2 * N * KT * C_in * P_in + 10 * N * ss * C_out * P_cls,
        transcendentals=N * C_out,
        bytes_accessed=(x_flat.size * isz + w_all.size * isz
                        + col_idx.size * 4 + N * ss * C_out * P_cls * 4))

    out_flat = pl.pallas_call(
        kernel,
        out_shape=jax.ShapeDtypeStruct((N, ss * C_out, P_cls), jnp.float32),
        grid_spec=pltpu.PrefetchScalarGridSpec(
            num_scalar_prefetch=0,
            grid=(N,),
            in_specs=[
                pl.BlockSpec((1, C_in, P_in), lambda n: (n, 0, 0)),
                pl.BlockSpec((KT, C_in), lambda n: (0, 0)),
                pl.BlockSpec((1, P_in), lambda n: (0, 0)),
            ],
            out_specs=pl.BlockSpec((1, ss * C_out, P_cls),
                                   lambda n: (n, 0, 0)),
        ),
        compiler_params=pltpu.CompilerParams(
            dimension_semantics=("parallel",),
            vmem_limit_bytes=vmem_limit),
        cost_estimate=cost,
    )(x_flat, w_all, col_idx)

    # (N, s*s*C_out, H_cls*W) -> interleave parity classes -> NCHW
    out = out_flat.reshape(N, s, s, C_out, H_cls, W)
    out = out.transpose(0, 3, 4, 1, 5, 2).reshape(N, C_out, H_out, W_out)
    return out


# --------------------------------------------------------------------------
# Pure-JAX reference (XLA conv) for correctness checking
# --------------------------------------------------------------------------
def _reference(x, weight, bias, *, stride, padding, output_padding,
               apply_activation=True, eps=1e-5):
    C_in, C_out, kh, kw = weight.shape
    w_t = jnp.transpose(weight[:, :, ::-1, ::-1], (1, 0, 2, 3))
    pad = [(kh - 1 - padding, kh - 1 - padding + output_padding),
           (kw - 1 - padding, kw - 1 - padding + output_padding)]
    y = lax.conv_general_dilated(
        x, w_t, window_strides=(1, 1), padding=pad,
        lhs_dilation=(stride, stride),
        dimension_numbers=("NCHW", "OIHW", "NCHW"),
        precision=lax.Precision.HIGHEST)
    y = y + bias.reshape(1, C_out, 1, 1)
    mean = jnp.mean(y, axis=(2, 3), keepdims=True)
    var = jnp.mean((y - mean) ** 2, axis=(2, 3), keepdims=True)
    y = (y - mean) * lax.rsqrt(var + eps)
    if apply_activation:
        y = jnp.maximum(y, 0.0)
    return y


if __name__ == "__main__":
    # CycleGAN upsampling block: ConvTranspose2d(k=3, s=2, p=1, op=1) + IN + ReLU
    N, C_in, C_out, H, W = 2, 4, 4, 16, 16
    kh = kw = 3
    stride, padding, output_padding = 2, 1, 1

    key = jax.random.PRNGKey(0)
    kx, kw_, kb = jax.random.split(key, 3)
    x = jax.random.normal(kx, (N, C_in, H, W), dtype=jnp.float32)
    fan = C_in * kh * kw
    weight = jax.random.uniform(kw_, (C_in, C_out, kh, kw), jnp.float32,
                                minval=-1.0, maxval=1.0) / math.sqrt(fan)
    bias = jax.random.uniform(kb, (C_out,), jnp.float32,
                              minval=-1.0, maxval=1.0) / math.sqrt(fan)

    out = upsampling_conv_block(
        x, weight, bias, stride=stride, padding=padding,
        output_padding=output_padding, apply_activation=True)
    out = jax.block_until_ready(out)

    H_out = (H - 1) * stride - 2 * padding + kh + output_padding
    W_out = (W - 1) * stride - 2 * padding + kw + output_padding
    assert out.shape == (N, C_out, H_out, W_out)

    # Strict check: same bf16-rounded matmul operands the kernel sees, full
    # PyTorch forward semantics (bias included -- it cancels in InstanceNorm).
    xq = x.astype(jnp.bfloat16).astype(jnp.float32)
    wq = weight.astype(jnp.bfloat16).astype(jnp.float32)
    ref_q = _reference(xq, wq, bias, stride=stride, padding=padding,
                       output_padding=output_padding, apply_activation=True)
    assert jnp.allclose(out, ref_q, atol=5e-3, rtol=5e-3), (
        f"max abs diff vs bf16-operand reference: "
        f"{jnp.max(jnp.abs(out - ref_q))}")

    # Loose sanity check vs the exact f32 module (bf16 operand quantization is
    # the only intended deviation).
    ref = _reference(x, weight, bias, stride=stride, padding=padding,
                     output_padding=output_padding, apply_activation=True)
    assert jnp.allclose(out, ref, atol=1e-1, rtol=1e-1), (
        f"max abs diff vs f32 reference: {jnp.max(jnp.abs(out - ref))}")

    print("KERNEL_OK")
</pallas_src>

<mosaic_0001>
module attributes {stable_mosaic.version = 11 : i64} {
  func.func @_upconv_in_relu_kernel(%arg0: i32, %arg1: memref<1x4x256xbf16, #tpu.memory_space<vmem>>, %arg2: memref<36x4xbf16, #tpu.memory_space<vmem>>, %arg3: memref<1x256xi32, #tpu.memory_space<vmem>>, %arg4: memref<1x16x256xf32, #tpu.memory_space<vmem>>) attributes {dimension_semantics = [#tpu.dimension_semantics<parallel>], iteration_bounds = array<i64: 2>, scalar_prefetch = 0 : i64, scratch_operands = 0 : i64, tpu.core_type = #tpu.core_type<tc>, window_params = [{transform_indices = @transform_0, window_bounds = array<i64: 1, 4, 256>}, {pipeline_mode = #tpu.pipeline_mode<synchronous>, transform_indices = @transform_1, window_bounds = array<i64: 36, 4>}, {pipeline_mode = #tpu.pipeline_mode<synchronous>, transform_indices = @transform_2, window_bounds = array<i64: 1, 256>}, {transform_indices = @transform_3, window_bounds = array<i64: 1, 16, 256>}]} {
    %c0 = arith.constant 0 : index
    %c0_0 = arith.constant 0 : index
    %0 = vector.load %arg2[%c0, %c0_0] : memref<36x4xbf16, #tpu.memory_space<vmem>>, vector<36x4xbf16>
    %c0_1 = arith.constant 0 : index
    %c0_2 = arith.constant 0 : index
    %c0_3 = arith.constant 0 : index
    %1 = vector.load %arg1[%c0_1, %c0_2, %c0_3] : memref<1x4x256xbf16, #tpu.memory_space<vmem>>, vector<1x4x256xbf16>
    %2 = vector.shape_cast %1 : vector<1x4x256xbf16> to vector<4x256xbf16>
    %cst = arith.constant dense<0.000000e+00> : vector<36x256xf32>
    %3 = tpu.matmul %0, %2, %cst {dimension_numbers = #tpu.dot_dimension_numbers<[1], [0], [0], [1], [0, 0, 1, 1], [], []>} : vector<36x4xbf16>, vector<4x256xbf16>, vector<36x256xf32> -> vector<36x256xf32>
    %c0_4 = arith.constant 0 : index
    %c0_5 = arith.constant 0 : index
    %4 = vector.load %arg3[%c0_4, %c0_5] : memref<1x256xi32, #tpu.memory_space<vmem>>, vector<1x256xi32>
    %cst_6 = arith.constant 0.000000e+00 : f32
    %5 = vector.broadcast %cst_6 : f32 to vector<1x16x256xf32>
    %c0_7 = arith.constant 0 : index
    %c0_8 = arith.constant 0 : index
    %c0_9 = arith.constant 0 : index
    %6 = vector.load %arg4[%c0_7, %c0_8, %c0_9] : memref<1x16x256xf32, #tpu.memory_space<vmem>>, vector<1x16x256xf32>
    tpu.vector_store %arg4[%c0_7, %c0_8, %c0_9], %5 {strides = array<i32>} : memref<1x16x256xf32, #tpu.memory_space<vmem>>, vector<1x16x256xf32>,
    %7 = vector.extract_strided_slice %3 {offsets = [0, 17], sizes = [4, 239], strides = [1, 1]} : vector<36x256xf32> to vector<4x239xf32>
    %c1_i32 = arith.constant 1 : i32
    %8 = vector.broadcast %c1_i32 : i32 to vector<1x256xi32>
    %9 = arith.cmpi sge, %4, %8 : vector<1x256xi32>
    %c16_i32 = arith.constant 16 : i32
    %10 = vector.broadcast %c16_i32 : i32 to vector<1x256xi32>
    %11 = arith.cmpi slt, %4, %10 : vector<1x256xi32>
    %12 = arith.andi %9, %11 : vector<1x256xi1>
    %13 = vector.extract_strided_slice %12 {offsets = [0, 17], sizes = [1, 239], strides = [1, 1]} : vector<1x256xi1> to vector<1x239xi1>
    %cst_10 = arith.constant 0.000000e+00 : f32
    %14 = vector.shape_cast %13 : vector<1x239xi1> to vector<1x239xi1>
    %15 = vector.broadcast %14 : vector<1x239xi1> to vector<4x239xi1>
    %16 = vector.broadcast %cst_10 : f32 to vector<4x239xf32>
    %17 = arith.select %15, %7, %16 : vector<4x239xi1>, vector<4x239xf32>
    %c0_11 = arith.constant 0 : index
    %c12 = arith.constant 12 : index
    %c0_12 = arith.constant 0 : index
    %18 = vector.load %arg4[%c0_11, %c12, %c0_12] : memref<1x16x256xf32, #tpu.memory_space<vmem>>, vector<1x4x239xf32>
    %19 = vector.shape_cast %18 : vector<1x4x239xf32> to vector<4x239xf32>
    %20 = arith.addf %19, %17 : vector<4x239xf32>
    %c0_13 = arith.constant 0 : index
    %c12_14 = arith.constant 12 : index
    %c0_15 = arith.constant 0 : index
    %21 = vector.load %arg4[%c0_13, %c12_14, %c0_15] : memref<1x16x256xf32, #tpu.memory_space<vmem>>, vector<1x4x239xf32>
    %22 = vector.shape_cast %21 : vector<1x4x239xf32> to vector<4x239xf32>
    %23 = vector.shape_cast %20 : vector<4x239xf32> to vector<1x4x239xf32>
    tpu.vector_store %arg4[%c0_13, %c12_14, %c0_15], %23 {strides = array<i32>} : memref<1x16x256xf32, #tpu.memory_space<vmem>>, vector<1x4x239xf32>,
    %24 = vector.extract_strided_slice %3 {offsets = [4, 16], sizes = [4, 240], strides = [1, 1]} : vector<36x256xf32> to vector<4x240xf32>
    %c0_16 = arith.constant 0 : index
    %c8 = arith.constant 8 : index
    %c0_17 = arith.constant 0 : index
    %25 = vector.load %arg4[%c0_16, %c8, %c0_17] : memref<1x16x256xf32, #tpu.memory_space<vmem>>, vector<1x4x240xf32>
    %26 = vector.shape_cast %25 : vector<1x4x240xf32> to vector<4x240xf32>
    %27 = arith.addf %26, %24 : vector<4x240xf32>
    %c0_18 = arith.constant 0 : index
    %c8_19 = arith.constant 8 : index
    %c0_20 = arith.constant 0 : index
    %28 = vector.load %arg4[%c0_18, %c8_19, %c0_20] : memref<1x16x256xf32, #tpu.memory_space<vmem>>, vector<1x4x240xf32>
    %29 = vector.shape_cast %28 : vector<1x4x240xf32> to vector<4x240xf32>
    %30 = vector.shape_cast %27 : vector<4x240xf32> to vector<1x4x240xf32>
    tpu.vector_store %arg4[%c0_18, %c8_19, %c0_20], %30 {strides = array<i32>} : memref<1x16x256xf32, #tpu.memory_space<vmem>>, vector<1x4x240xf32>,
    %31 = vector.extract_strided_slice %3 {offsets = [8, 16], sizes = [4, 240], strides = [1, 1]} : vector<36x256xf32> to vector<4x240xf32>
    %c0_21 = arith.constant 0 : index
    %c12_22 = arith.constant 12 : index
    %c0_23 = arith.constant 0 : index
    %32 = vector.load %arg4[%c0_21, %c12_22, %c0_23] : memref<1x16x256xf32, #tpu.memory_space<vmem>>, vector<1x4x240xf32>
    %33 = vector.shape_cast %32 : vector<1x4x240xf32> to vector<4x240xf32>
    %34 = arith.addf %33, %31 : vector<4x240xf32>
    %c0_24 = arith.constant 0 : index
    %c12_25 = arith.constant 12 : index
    %c0_26 = arith.constant 0 : index
    %35 = vector.load %arg4[%c0_24, %c12_25, %c0_26] : memref<1x16x256xf32, #tpu.memory_space<vmem>>, vector<1x4x240xf32>
    %36 = vector.shape_cast %35 : vector<1x4x240xf32> to vector<4x240xf32>
    %37 = vector.shape_cast %34 : vector<4x240xf32> to vector<1x4x240xf32>
    tpu.vector_store %arg4[%c0_24, %c12_25, %c0_26], %37 {strides = array<i32>} : memref<1x16x256xf32, #tpu.memory_space<vmem>>, vector<1x4x240xf32>,
    %38 = vector.extract_strided_slice %3 {offsets = [12, 1], sizes = [4, 255], strides = [1, 1]} : vector<36x256xf32> to vector<4x255xf32>
    %c1_i32_27 = arith.constant 1 : i32
    %39 = vector.broadcast %c1_i32_27 : i32 to vector<1x256xi32>
    %40 = arith.cmpi sge, %4, %39 : vector<1x256xi32>
    %c16_i32_28 = arith.constant 16 : i32
    %41 = vector.broadcast %c16_i32_28 : i32 to vector<1x256xi32>
    %42 = arith.cmpi slt, %4, %41 : vector<1x256xi32>
    %43 = arith.andi %40, %42 : vector<1x256xi1>
    %44 = vector.extract_strided_slice %43 {offsets = [0, 1], sizes = [1, 255], strides = [1, 1]} : vector<1x256xi1> to vector<1x255xi1>
    %cst_29 = arith.constant 0.000000e+00 : f32
    %45 = vector.shape_cast %44 : vector<1x255xi1> to vector<1x255xi1>
    %46 = vector.broadcast %45 : vector<1x255xi1> to vector<4x255xi1>
    %47 = vector.broadcast %cst_29 : f32 to vector<4x255xf32>
    %48 = arith.select %46, %38, %47 : vector<4x255xi1>, vector<4x255xf32>
    %c0_30 = arith.constant 0 : index
    %c4 = arith.constant 4 : index
    %c0_31 = arith.constant 0 : index
    %49 = vector.load %arg4[%c0_30, %c4, %c0_31] : memref<1x16x256xf32, #tpu.memory_space<vmem>>, vector<1x4x255xf32>
    %50 = vector.shape_cast %49 : vector<1x4x255xf32> to vector<4x255xf32>
    %51 = arith.addf %50, %48 : vector<4x255xf32>
    %c0_32 = arith.constant 0 : index
    %c4_33 = arith.constant 4 : index
    %c0_34 = arith.constant 0 : index
    %52 = vector.load %arg4[%c0_32, %c4_33, %c0_34] : memref<1x16x256xf32, #tpu.memory_space<vmem>>, vector<1x4x255xf32>
    %53 = vector.shape_cast %52 : vector<1x4x255xf32> to vector<4x255xf32>
    %54 = vector.shape_cast %51 : vector<4x255xf32> to vector<1x4x255xf32>
    tpu.vector_store %arg4[%c0_32, %c4_33, %c0_34], %54 {strides = array<i32>} : memref<1x16x256xf32, #tpu.memory_space<vmem>>, vector<1x4x255xf32>,
    %55 = vector.extract_strided_slice %3 {offsets = [16, 0], sizes = [4, 256], strides = [1, 1]} : vector<36x256xf32> to vector<4x256xf32>
    %c0_35 = arith.constant 0 : index
    %c0_36 = arith.constant 0 : index
    %c0_37 = arith.constant 0 : index
    %56 = vector.load %arg4[%c0_35, %c0_36, %c0_37] : memref<1x16x256xf32, #tpu.memory_space<vmem>>, vector<1x4x256xf32>
    %57 = vector.shape_cast %56 : vector<1x4x256xf32> to vector<4x256xf32>
    %58 = arith.addf %57, %55 : vector<4x256xf32>
    %c0_38 = arith.constant 0 : index
    %c0_39 = arith.constant 0 : index
    %c0_40 = arith.constant 0 : index
    %59 = vector.load %arg4[%c0_38, %c0_39, %c0_40] : memref<1x16x256xf32, #tpu.memory_space<vmem>>, vector<1x4x256xf32>
    %60 = vector.shape_cast %59 : vector<1x4x256xf32> to vector<4x256xf32>
    %61 = vector.shape_cast %58 : vector<4x256xf32> to vector<1x4x256xf32>
    tpu.vector_store %arg4[%c0_38, %c0_39, %c0_40], %61 {strides = array<i32>} : memref<1x16x256xf32, #tpu.memory_space<vmem>>, vector<1x4x256xf32>,
    %62 = vector.extract_strided_slice %3 {offsets = [20, 0], sizes = [4, 256], strides = [1, 1]} : vector<36x256xf32> to vector<4x256xf32>
    %c0_41 = arith.constant 0 : index
    %c4_42 = arith.constant 4 : index
    %c0_43 = arith.constant 0 : index
    %63 = vector.load %arg4[%c0_41, %c4_42, %c0_43] : memref<1x16x256xf32, #tpu.memory_space<vmem>>, vector<1x4x256xf32>
    %64 = vector.shape_cast %63 : vector<1x4x256xf32> to vector<4x256xf32>
    %65 = arith.addf %64, %62 : vector<4x256xf32>
    %c0_44 = arith.constant 0 : index
    %c4_45 = arith.constant 4 : index
    %c0_46 = arith.constant 0 : index
    %66 = vector.load %arg4[%c0_44, %c4_45, %c0_46] : memref<1x16x256xf32, #tpu.memory_space<vmem>>, vector<1x4x256xf32>
    %67 = vector.shape_cast %66 : vector<1x4x256xf32> to vector<4x256xf32>
    %68 = vector.shape_cast %65 : vector<4x256xf32> to vector<1x4x256xf32>
    tpu.vector_store %arg4[%c0_44, %c4_45, %c0_46], %68 {strides = array<i32>} : memref<1x16x256xf32, #tpu.memory_space<vmem>>, vector<1x4x256xf32>,
    %69 = vector.extract_strided_slice %3 {offsets = [24, 1], sizes = [4, 255], strides = [1, 1]} : vector<36x256xf32> to vector<4x255xf32>
    %c1_i32_47 = arith.constant 1 : i32
    %70 = vector.broadcast %c1_i32_47 : i32 to vector<1x256xi32>
    %71 = arith.cmpi sge, %4, %70 : vector<1x256xi32>
    %c16_i32_48 = arith.constant 16 : i32
    %72 = vector.broadcast %c16_i32_48 : i32 to vector<1x256xi32>
    %73 = arith.cmpi slt, %4, %72 : vector<1x256xi32>
    %74 = arith.andi %71, %73 : vector<1x256xi1>
    %75 = vector.extract_strided_slice %74 {offsets = [0, 1], sizes = [1, 255], strides = [1, 1]} : vector<1x256xi1> to vector<1x255xi1>
    %cst_49 = arith.constant 0.000000e+00 : f32
    %76 = vector.shape_cast %75 : vector<1x255xi1> to vector<1x255xi1>
    %77 = vector.broadcast %76 : vector<1x255xi1> to vector<4x255xi1>
    %78 = vector.broadcast %cst_49 : f32 to vector<4x255xf32>
    %79 = arith.select %77, %69, %78 : vector<4x255xi1>, vector<4x255xf32>
    %c0_50 = arith.constant 0 : index
    %c12_51 = arith.constant 12 : index
    %c0_52 = arith.constant 0 : index
    %80 = vector.load %arg4[%c0_50, %c12_51, %c0_52] : memref<1x16x256xf32, #tpu.memory_space<vmem>>, vector<1x4x255xf32>
    %81 = vector.shape_cast %80 : vector<1x4x255xf32> to vector<4x255xf32>
    %82 = arith.addf %81, %79 : vector<4x255xf32>
    %c0_53 = arith.constant 0 : index
    %c12_54 = arith.constant 12 : index
    %c0_55 = arith.constant 0 : index
    %83 = vector.load %arg4[%c0_53, %c12_54, %c0_55] : memref<1x16x256xf32, #tpu.memory_space<vmem>>, vector<1x4x255xf32>
    %84 = vector.shape_cast %83 : vector<1x4x255xf32> to vector<4x255xf32>
    %85 = vector.shape_cast %82 : vector<4x255xf32> to vector<1x4x255xf32>
    tpu.vector_store %arg4[%c0_53, %c12_54, %c0_55], %85 {strides = array<i32>} : memref<1x16x256xf32, #tpu.memory_space<vmem>>, vector<1x4x255xf32>,
    %86 = vector.extract_strided_slice %3 {offsets = [28, 0], sizes = [4, 256], strides = [1, 1]} : vector<36x256xf32> to vector<4x256xf32>
    %c0_56 = arith.constant 0 : index
    %c8_57 = arith.constant 8 : index
    %c0_58 = arith.constant 0 : index
    %87 = vector.load %arg4[%c0_56, %c8_57, %c0_58] : memref<1x16x256xf32, #tpu.memory_space<vmem>>, vector<1x4x256xf32>
    %88 = vector.shape_cast %87 : vector<1x4x256xf32> to vector<4x256xf32>
    %89 = arith.addf %88, %86 : vector<4x256xf32>
    %c0_59 = arith.constant 0 : index
    %c8_60 = arith.constant 8 : index
    %c0_61 = arith.constant 0 : index
    %90 = vector.load %arg4[%c0_59, %c8_60, %c0_61] : memref<1x16x256xf32, #tpu.memory_space<vmem>>, vector<1x4x256xf32>
    %91 = vector.shape_cast %90 : vector<1x4x256xf32> to vector<4x256xf32>
    %92 = vector.shape_cast %89 : vector<4x256xf32> to vector<1x4x256xf32>
    tpu.vector_store %arg4[%c0_59, %c8_60, %c0_61], %92 {strides = array<i32>} : memref<1x16x256xf32, #tpu.memory_space<vmem>>, vector<1x4x256xf32>,
    %93 = vector.extract_strided_slice %3 {offsets = [32, 0], sizes = [4, 256], strides = [1, 1]} : vector<36x256xf32> to vector<4x256xf32>
    %c0_62 = arith.constant 0 : index
    %c12_63 = arith.constant 12 : index
    %c0_64 = arith.constant 0 : index
    %94 = vector.load %arg4[%c0_62, %c12_63, %c0_64] : memref<1x16x256xf32, #tpu.memory_space<vmem>>, vector<1x4x256xf32>
    %95 = vector.shape_cast %94 : vector<1x4x256xf32> to vector<4x256xf32>
    %96 = arith.addf %95, %93 : vector<4x256xf32>
    %c0_65 = arith.constant 0 : index
    %c12_66 = arith.constant 12 : index
    %c0_67 = arith.constant 0 : index
    %97 = vector.load %arg4[%c0_65, %c12_66, %c0_67] : memref<1x16x256xf32, #tpu.memory_space<vmem>>, vector<1x4x256xf32>
    %98 = vector.shape_cast %97 : vector<1x4x256xf32> to vector<4x256xf32>
    %99 = vector.shape_cast %96 : vector<4x256xf32> to vector<1x4x256xf32>
    tpu.vector_store %arg4[%c0_65, %c12_66, %c0_67], %99 {strides = array<i32>} : memref<1x16x256xf32, #tpu.memory_space<vmem>>, vector<1x4x256xf32>,
    %c0_68 = arith.constant 0 : index
    %c0_69 = arith.constant 0 : index
    %c0_70 = arith.constant 0 : index
    %100 = vector.load %arg4[%c0_68, %c0_69, %c0_70] : memref<1x16x256xf32, #tpu.memory_space<vmem>>, vector<1x16x256xf32>
    %101 = vector.shape_cast %100 : vector<1x16x256xf32> to vector<16x256xf32>
    %102 = vector.shape_cast %101 : vector<16x256xf32> to vector<4x4x256xf32>
    %cst_71 = arith.constant dense<0.000000e+00> : vector<4x4xf32>
    %103 = vector.multi_reduction <add>, %102, %cst_71 [2] : vector<4x4x256xf32> to vector<4x4xf32>
    %104 = vector.shape_cast %103 : vector<4x4xf32> to vector<4x4x1xf32>
    %cst_72 = arith.constant dense<0.000000e+00> : vector<4x1xf32>
    %105 = vector.multi_reduction <add>, %104, %cst_72 [0] : vector<4x4x1xf32> to vector<4x1xf32>
    %106 = vector.shape_cast %105 : vector<4x1xf32> to vector<1x4x1xf32>
    %cst_73 = arith.constant 9.765625E-4 : f32
    %107 = vector.broadcast %cst_73 : f32 to vector<1x4x1xf32>
    %108 = arith.mulf %106, %107 : vector<1x4x1xf32>
    %109 = vector.broadcast %108 : vector<1x4x1xf32> to vector<4x4x256xf32>
    %110 = arith.subf %102, %109 : vector<4x4x256xf32>
    %111 = arith.mulf %110, %110 : vector<4x4x256xf32>
    %cst_74 = arith.constant dense<0.000000e+00> : vector<4x4xf32>
    %112 = vector.multi_reduction <add>, %111, %cst_74 [2] : vector<4x4x256xf32> to vector<4x4xf32>
    %113 = vector.shape_cast %112 : vector<4x4xf32> to vector<4x4x1xf32>
    %cst_75 = arith.constant dense<0.000000e+00> : vector<4x1xf32>
    %114 = vector.multi_reduction <add>, %113, %cst_75 [0] : vector<4x4x1xf32> to vector<4x1xf32>
    %115 = vector.shape_cast %114 : vector<4x1xf32> to vector<1x4x1xf32>
    %cst_76 = arith.constant 9.765625E-4 : f32
    %116 = vector.broadcast %cst_76 : f32 to vector<1x4x1xf32>
    %117 = arith.mulf %115, %116 : vector<1x4x1xf32>
    %cst_77 = arith.constant 9.99999974E-6 : f32
    %118 = vector.broadcast %cst_77 : f32 to vector<1x4x1xf32>
    %119 = arith.addf %117, %118 : vector<1x4x1xf32>
    %120 = math.rsqrt %119 : vector<1x4x1xf32>
    %121 = vector.broadcast %120 : vector<1x4x1xf32> to vector<4x4x256xf32>
    %122 = arith.mulf %110, %121 : vector<4x4x256xf32>
    %cst_78 = arith.constant 0.000000e+00 : f32
    %123 = vector.broadcast %cst_78 : f32 to vector<4x4x256xf32>
    %124 = arith.maximumf %122, %123 : vector<4x4x256xf32>
    %125 = vector.shape_cast %124 : vector<4x4x256xf32> to vector<16x256xf32>
    %c0_79 = arith.constant 0 : index
    %c0_80 = arith.constant 0 : index
    %c0_81 = arith.constant 0 : index
    %126 = vector.load %arg4[%c0_79, %c0_80, %c0_81] : memref<1x16x256xf32, #tpu.memory_space<vmem>>, vector<1x16x256xf32>
    %127 = vector.shape_cast %126 : vector<1x16x256xf32> to vector<16x256xf32>
    %128 = vector.shape_cast %125 : vector<16x256xf32> to vector<1x16x256xf32>
    tpu.vector_store %arg4[%c0_79, %c0_80, %c0_81], %128 {strides = array<i32>} : memref<1x16x256xf32, #tpu.memory_space<vmem>>, vector<1x16x256xf32>,
    return
  }
  func.func @transform_0(%arg0: i32) -> (i32, i32, i32) {
    %c0_i32 = arith.constant 0 : i32
    %c0_i32_0 = arith.constant 0 : i32
    %c0_i32_1 = arith.constant 0 : i32
    return %arg0, %c0_i32, %c0_i32_0 : i32, i32, i32
  }
  func.func @transform_1(%arg0: i32) -> (i32, i32) {
    %c0_i32 = arith.constant 0 : i32
    %c0_i32_0 = arith.constant 0 : i32
    %c0_i32_1 = arith.constant 0 : i32
    return %c0_i32, %c0_i32_0 : i32, i32
  }
  func.func @transform_2(%arg0: i32) -> (i32, i32) {
    %c0_i32 = arith.constant 0 : i32
    %c0_i32_0 = arith.constant 0 : i32
    %c0_i32_1 = arith.constant 0 : i32
    return %c0_i32, %c0_i32_0 : i32, i32
  }
  func.func @transform_3(%arg0: i32) -> (i32, i32, i32) {
    %c0_i32 = arith.constant 0 : i32
    %c0_i32_0 = arith.constant 0 : i32
    %c0_i32_1 = arith.constant 0 : i32
    return %arg0, %c0_i32, %c0_i32_0 : i32, i32, i32
  }
}

</mosaic_0001>

<llo_original>
// kernel: tpu_custom_call.1
$region0: #{tpu_custom_call.1}
  #allocation0 [shape = 'u32[]', space=smem, size = 0x4, offset = 0x4, fixed_abs, tag = 'smem constant byte address 0x4 - core index']
  #allocation1 [shape = 'u32[144,128]{1,0:T(1,128)}', space=vmem, size = 0x12000, scoped, tag = 'internal scratch']
  %s0 = inlined_call_operand.vmem [shape: bf16[2,4,256], index: 0, kind: input, shape index: {}]
  %s1 = inlined_call_operand.vmem [shape: bf16[36,4], index: 1, kind: input, shape index: {}]
  %s2 = inlined_call_operand.vmem [shape: s32[1,256], index: 2, kind: input, shape index: {}]
  %s3 = inlined_call_operand.hbm [shape: f32[2,16,256], index: 3, kind: output, shape index: {}]
  %s4 = sld [smem:[#allocation0]]
  $region45: #{tpu_custom_call.1} parent=0
    _
  %s6 = ssub.s32 1, %s4
  %s7 = scalar_select 0, %s6, %s4
  $region1: #{tpu_custom_call.1} parent=0
    #allocation2 [shape = 'u8[32768]{0}', space=vmem, size = 0x8000, scoped, tag = 'output window, operand 0']
    #allocation3 [shape = 's32[2]{0}', space=sflag, size = 0x8, scoped, tag = 'scoped memory for tpu_custom_call.1']
    %8 = vsyncpa [#allocation3], 0
    %s9 = scalar_lea.sflag [#allocation3], 1
    %10 = vsyncpa %s9, 0
    loop: start=0, step=1, limit=4
    $region2: #{tpu_custom_call.1} parent=1 // loop_pre_header
      _
    $region3: #{tpu_custom_call.1} parent=1 // loop_header
      %s12 = sphi 0, %s16
      %p13 = scmp.ge.s32.totalorder %s12, 4
      %s22 = sphi 0, %s24
      %s25 = sphi 0, %s22
      %s26 = sphi 0, %s25
      %s42 = sphi 0, %s26
      %s46 = sphi 0, %s46
      %s48 = sphi 0, %s46
      %s49 = sphi 0, %s48
      %s63 = sphi 0, %s49
      %s67 = sphi 0, %s67
      %s69 = sphi 0, %s67
      %s70 = sphi 0, %s69
      %s84 = sphi 0, %s70
      %s90 = sphi 0, %s92
      %s93 = sphi 0, %s90
      %s94 = sphi 0, %s93
      %s110 = sphi 0, %s94
    $region4: #{tpu_custom_call.1} parent=1 // loop_header_branch
      %15 = sbr.rel (%p13) target = $region8
    $region5: #{tpu_custom_call.1} parent=1 // loop_body
      %s17 = ssub.s32 %s12, 1
      %s18 = ssub.s32 %s12, 2
      %s19 = sadd.s32 %s12, 1
      %s20 = ssub.s32 %s12, %s19
      %p21 = scmp.eq.s32.totalorder %s20, 0
      %s23 = sadd.s32 %s22, 1
      %s24 = scalar_select %p21, %s22, %s23
      %p27 = pneg %p21
      %p28 = scmp.eq.s32.totalorder %s12, 1
      %p29 = por %p27, %p28
      %p30 = scmp.ne.s32.totalorder %s22, %s25
      %p31 = scmp.eq.s32.totalorder %s12, 0
      %p32 = por %p30, %p31
      %p33 = scmp.ne.s32.totalorder %s22, %s25
      %p34 = scmp.eq.s32.totalorder %s17, 1
      %p35 = por %p33, %p34
      %p36 = scmp.ne.s32.totalorder %s25, %s26
      %p37 = scmp.eq.s32.totalorder %s17, 0
      %p38 = por %p36, %p37
      %p39 = scmp.ne.s32.totalorder %s25, %s26
      %p40 = scmp.eq.s32.totalorder %s18, 1
      %p41 = por %p39, %p40
      %p43 = scmp.ne.s32.totalorder %s26, %s42
      %p44 = scmp.eq.s32.totalorder %s18, 0
      %p45 = por %p43, %p44
      %s47 = sadd.s32 %s46, 1
      %p50 = scmp.eq.s32.totalorder %s12, 1
      %p51 = scmp.ne.s32.totalorder %s46, %s48
      %p52 = scmp.eq.s32.totalorder %s12, 0
      %p53 = por %p51, %p52
      %p54 = scmp.ne.s32.totalorder %s46, %s48
      %p55 = scmp.eq.s32.totalorder %s17, 1
      %p56 = por %p54, %p55
      %p57 = scmp.ne.s32.totalorder %s48, %s49
      %p58 = scmp.eq.s32.totalorder %s17, 0
      %p59 = por %p57, %p58
      %p60 = scmp.ne.s32.totalorder %s48, %s49
      %p61 = scmp.eq.s32.totalorder %s18, 1
      %p62 = por %p60, %p61
      %p64 = scmp.ne.s32.totalorder %s49, %s63
      %p65 = scmp.eq.s32.totalorder %s18, 0
      %p66 = por %p64, %p65
      %s68 = sadd.s32 %s67, 1
      %p71 = scmp.eq.s32.totalorder %s12, 1
      %p72 = scmp.ne.s32.totalorder %s67, %s69
      %p73 = scmp.eq.s32.totalorder %s12, 0
      %p74 = por %p72, %p73
      %p75 = scmp.ne.s32.totalorder %s67, %s69
      %p76 = scmp.eq.s32.totalorder %s17, 1
      %p77 = por %p75, %p76
      %p78 = scmp.ne.s32.totalorder %s69, %s70
      %p79 = scmp.eq.s32.totalorder %s17, 0
      %p80 = por %p78, %p79
      %p81 = scmp.ne.s32.totalorder %s69, %s70
      %p82 = scmp.eq.s32.totalorder %s18, 1
      %p83 = por %p81, %p82
      %p85 = scmp.ne.s32.totalorder %s70, %s84
      %p86 = scmp.eq.s32.totalorder %s18, 0
      %p87 = por %p85, %p86
      %s88 = ssub.s32 %s12, %s19
      %p89 = scmp.eq.s32.totalorder %s88, 0
      %s91 = sadd.s32 %s90, 1
      %s92 = scalar_select %p89, %s90, %s91
      %p95 = pneg %p89
      %p96 = scmp.eq.s32.totalorder %s12, 1
      %p97 = por %p95, %p96
      %p98 = scmp.ne.s32.totalorder %s90, %s93
      %p99 = scmp.eq.s32.totalorder %s12, 0
      %p100 = por %p98, %p99
      %p101 = scmp.ne.s32.totalorder %s90, %s93
      %p102 = scmp.eq.s32.totalorder %s17, 1
      %p103 = por %p101, %p102
      %p104 = scmp.ne.s32.totalorder %s93, %s94
      %p105 = scmp.eq.s32.totalorder %s17, 0
      %p106 = por %p104, %p105
      %p107 = scmp.ne.s32.totalorder %s93, %s94
      %p108 = scmp.eq.s32.totalorder %s18, 1
      %p109 = por %p107, %p108
      %p111 = scmp.ne.s32.totalorder %s94, %s110
      %p112 = scmp.eq.s32.totalorder %s18, 0
      %p113 = por %p111, %p112
      %p114 = scmp.le.s32.totalorder 1, %s12
      %p115 = scmp.lt.s32.totalorder %s12, 3
      %p116 = pnand %p114, %p115
      %p117 = pneg %p116
      // Predicated region
      $region9: #{tpu_custom_call.1} parent=5 // pred_check
        _
      $region10: #{tpu_custom_call.1} parent=5 // pred_check_branch
        %119 = sbr.rel (%p116) target = $region12
      $region11: #{tpu_custom_call.1} parent=5 // pred_region
        %s120 = ssub.s32 %s12, 1
        // Predicated region
        $region13: #{tpu_custom_call.1} parent=11 // pred_check
          %p121 = pneg %p59
        $region14: #{tpu_custom_call.1} parent=11 // pred_check_branch
          %123 = sbr.rel (%p121) target = $region16
        $region15: #{tpu_custom_call.1} parent=11 // pred_region
          _
        $region16: #{tpu_custom_call.1} parent=11 // pred_fallthru
          _
        // Predicated region
        $region17: #{tpu_custom_call.1} parent=11 // pred_check
          %p124 = pneg %p80
        $region18: #{tpu_custom_call.1} parent=11 // pred_check_branch
          %126 = sbr.rel (%p124) target = $region20
        $region19: #{tpu_custom_call.1} parent=11 // pred_region
          _
        $region20: #{tpu_custom_call.1} parent=11 // pred_fallthru
          _
      $region12: #{tpu_custom_call.1} parent=5 // pred_fallthru
        _
      %p127 = scmp.lt.s32.totalorder %s12, 2
      // Predicated region
      $region21: #{tpu_custom_call.1} parent=5 // pred_check
        %p128 = pneg %p127
      $region22: #{tpu_custom_call.1} parent=5 // pred_check_branch
        %130 = sbr.rel (%p128) target = $region24
      $region23: #{tpu_custom_call.1} parent=5 // pred_region
        // Predicated region
        $region25: #{tpu_custom_call.1} parent=23 // pred_check
          %p131 = pneg %p32
        $region26: #{tpu_custom_call.1} parent=23 // pred_check_branch
          %133 = sbr.rel (%p131) target = $region28
        $region27: #{tpu_custom_call.1} parent=23 // pred_region
          %p134 = scmp.lt.s32.totalorder %s12, 1
          %s135 = scalar_select %p134, %s12, 1
          %s136 = smul.addr %s135, 2
          %s137 = smul.addr %s136, 2
          %s138 = scalar_lea.vmem %s0, %s137
        $region28: #{tpu_custom_call.1} parent=23 // pred_fallthru
          _
      $region24: #{tpu_custom_call.1} parent=5 // pred_fallthru
        _
      %p139 = scmp.le.s32.totalorder 1, %s12
      %p140 = scmp.lt.s32.totalorder %s12, 3
      %p141 = pnand %p139, %p140
      %p142 = pneg %p141
      // Predicated region
      $region29: #{tpu_custom_call.1} parent=5 // pred_check
        _
      $region30: #{tpu_custom_call.1} parent=5 // pred_check_branch
        %144 = sbr.rel (%p141) target = $region32
      $region31: #{tpu_custom_call.1} parent=5 // pred_region
        %s145 = ssub.s32 %s12, 1
        %p146 = scmp.lt.s32.totalorder %s17, 1
        %s147 = scalar_select %p146, %s17, 1
        %s148 = smul.addr %s147, 2
        %s149 = smul.addr %s148, 2
        %s150 = scalar_lea.vmem %s0, %s149
        %p151 = pneg %p38
        %p152 = pneg %p35
        %p153 = pneg %p59
        %p154 = pneg %p56
        %p155 = pneg %p80
        %p156 = pneg %p77
        %p157 = pneg %p106
        %p158 = pneg %p103
        %s159 = sand.u32 %s93, 1
        %s160 = scalar_lea.sflag [#allocation3], %s159
        %s161 = sand.u32 %s93, 1
        %s162 = smul.addr %s161, 32
        %s163 = scalar_lea.vmem [#allocation2], %s162
        %p164 = scmp.lt.s32.totalorder %s17, 1
        %s165 = scalar_select %p164, %s17, 1
        %s166 = smul.addr %s165, 2
        %s167 = smul.addr %s166, 2
        %s168 = scalar_lea.vmem %s0, %s167
        %v170 = vld [vmem:[%s1] sm:$0xf]
        %v171 = vld [vmem:[%s1 + $0x4] sm:$0xf]
        %v172 = vld [vmem:[%s1 + $0x8] sm:$0xf]
        %v173 = vld [vmem:[%s1 + $0xc] sm:$0xf]
        %v174 = vld [vmem:[%s1 + $0x10] sm:$0x3]
        %v175 = vld [vmem:[%s168] sm:$0xf]
        %v181 = vunpack.c.l.b16 %v170
        %v182 = vunpack.c.l.b16 %v171
        %v183 = vunpack.c.l.b16 %v172
        %v184 = vunpack.c.l.b16 %v173
        %v185 = vunpack.c.l.b16 %v174
        %v186 = vpack.c.b16 %v182, %v181
        %v187 = vpack.c.b16 %v184, %v183
        %v188 = vpack.c.b16 %v185, %v185
        %v191 = vunpack.c.l.s4 1983009808
        %v192 = vunpack.c.0.s8 %v191
        %v193 = vlaneseq
        %v194 = vshrl.u32 %v193, 7
        %v195 = vsub.s32 %v192, %v194
        %v196 = vrot.slane %v175, %v195
        %v197 = vcombine.high %v196, %v196
        %vm198 = vcmask 31744
        %v200 = vsel %vm198, %v186, 0
        %v203 = vsel %vm198, %v187, 0
        %v206 = vsel %vm198, %v188, 0
        %vm208 = vcmask 1041408
        %v210 = vsel %vm208, %v196, 0
        %v213 = vsel %vm208, %v197, 0
        %215 = vmatprep.subr.bf16.mxu0 %v213
        %216 = vmatpush1.bf16.msra.mxu0 %v210
        %217 = vmatprep.subr.bf16.mxu0 0
        %218 = vmatpush1.bf16.msra.mxu0 0
        %219 = vmatprep.subr.bf16.mxu0 0
        %220 = vmatpush1.bf16.msra.mxu0 0
        %221 = vmatprep.subr.bf16.mxu0 0
        %222 = vmatpush1.bf16.msra.mxu0 0
        %223 = vmatprep.subr.bf16.mxu0 0
        %224 = vmatpush1.bf16.msra.mxu0 0
        %225 = vmatprep.subr.bf16.mxu0 0
        %226 = vmatpush1.bf16.msra.mxu0 0
        %227 = vmatprep.subr.bf16.mxu0 0
        %228 = vmatpush1.bf16.msra.mxu0 0
        %229 = vmatprep.subr.bf16.mxu0 0
        %230 = vmatpush1.bf16.msra.mxu0 0
        %231 = vmatprep.subr.bf16.mxu0 0
        %232 = vmatpush1.bf16.msra.mxu0 0
        %233 = vmatprep.subr.bf16.mxu0 0
        %234 = vmatpush1.bf16.msra.mxu0 0
        %235 = vmatprep.subr.bf16.mxu0 0
        %236 = vmatpush1.bf16.msra.mxu0 0
        %237 = vmatprep.subr.bf16.mxu0 0
        %238 = vmatpush1.bf16.msra.mxu0 0
        %239 = vmatprep.subr.bf16.mxu0 0
        %240 = vmatpush1.bf16.msra.mxu0 0
        %241 = vmatprep.subr.bf16.mxu0 0
        %242 = vmatpush1.bf16.msra.mxu0 0
        %243 = vmatprep.subr.bf16.mxu0 0
        %244 = vmatpush1.bf16.msra.mxu0 0
        %245 = vmatprep.subr.bf16.mxu0 0
        %246 = vmatpush1.bf16.msra.mxu0 0
        %247 = vmatprep.mubr.bf16.mxu0 0
        %248 = vmatmul.mubr.bf16.gmra.mrb[0].mxu0 %v200
        %v249 = vpop.f32.mrb[0].mxu0
        %v250 = vadd.f32 0.0, %v249
        %v251 = vpop.f32.mrb[0].mxu0
        %v252 = vadd.f32 0.0, %v251
        %v253 = vpop.f32.mrb[0].mxu0
        %v254 = vadd.f32 0.0, %v253
        %v255 = vpop.f32.mrb[0].mxu0
        %v256 = vadd.f32 0.0, %v255
        %257 = vmatprep.mubr.bf16.mxu0 0
        %258 = vmatmul.mubr.bf16.gmra.mrb[0].mxu0 %v203
        %v259 = vpop.f32.mrb[0].mxu0
        %v260 = vadd.f32 0.0, %v259
        %v261 = vpop.f32.mrb[0].mxu0
        %v262 = vadd.f32 0.0, %v261
        %v263 = vpop.f32.mrb[0].mxu0
        %v264 = vadd.f32 0.0, %v263
        %v265 = vpop.f32.mrb[0].mxu0
        %v266 = vadd.f32 0.0, %v265
        %267 = vmatprep.mubr.bf16.mxu0 0
        %268 = vmatmul.mubr.bf16.gmra.mrb[0].mxu0 %v206
        %v269 = vpop.f32.mrb[0].mxu0
        %v270 = vadd.f32 0.0, %v269
        %v271 = vpop.f32.mrb[0].mxu0
        %v272 = vadd.f32 0.0, %v271
        %v273 = vpop.f32.mrb[0].mxu0
        %v274 = vpop.f32.mrb[0].mxu0
        %275 = vdwg.mxu0
        %v276 = vld [vmem:[%s2] sm:$0x3]
        %277 = vst [vmem:[%s163] sm:$0xff] 0.0
        %278 = vst [vmem:[%s163 + $0x8] sm:$0xff] 0.0
        %279 = vst [vmem:[%s163 + $0x10] sm:$0xff] 0.0
        %280 = vst [vmem:[%s163 + $0x18] sm:$0xff] 0.0
        %vm281 = vcmp.ge.s32.totalorder %v276, 1
        %vm282 = vcmp.lt.s32.totalorder %v276, 16
        %vm283 = vmand %vm281, %vm282
        %v284 = vsel %vm283, 1, 0
        %v285 = vlaneseq
        %v286 = vshrl.u32 %v285, 7
        %v287 = vsub.s32 0, %v286
        %v288 = vrot.slane %v284, %v287
        %v289 = vlaneseq
        %v290 = vshrl.u32 %v289, 7
        %v291 = vsub.s32 1, %v290
        %v292 = vrot.slane %v284, %v291
        %vm293 = vcmp.eq.s32.totalorder %v288, 1
        %vm294 = vcmp.eq.s32.totalorder %v292, 1
        %v295 = vsel %vm293, %v250, 0.0
        %v296 = vsel %vm294, %v252, 0.0
        %v297 = vld [vmem:[%s163 + $0x10] sm:$0xf0]
        %v298 = vld [vmem:[%s163 + $0x18] sm:$0xf0]
        %v301 = vrot.slane %v295, 4
        %v302 = vrot.slane %v296, 4
        %303 = vrot.lane.b32.xlu0 %v301, 111
        %v304 = vpop.permute.xlu0 %303
        %305 = vrot.lane.b32.xlu0 %v302, 111
        %v306 = vpop.permute.xlu0 %305
        %vm307 = vcmask 908288
        %v308 = vsel %vm307, %v304, %v306
        %v311 = vadd.f32 %v297, %v308
        %v312 = vadd.f32 %v298, %v306
        %313 = vst [vmem:[%s163 + $0x10] sm:$0xf0] %v311
        %vm314 = vcmask 908292
        %315 = vst.msk [vmem:[%s163 + $0x18] sm:$0xf0] %vm314, %v312
        %v316 = vld [vmem:[%s163 + $0x10] sm:$0xf]
        %v317 = vld [vmem:[%s163 + $0x18] sm:$0xf]
        %v320 = vrot.slane %v250, 4
        %v321 = vrot.slane %v252, 4
        %322 = vrot.lane.b32.xlu0 %v320, 112
        %v323 = vpop.permute.xlu0 %322
        %324 = vrot.lane.b32.xlu0 %v321, 112
        %v325 = vpop.permute.xlu0 %324
        %vm326 = vcmask 916480
        %v327 = vsel %vm326, %v323, %v325
        %v330 = vadd.f32 %v316, %v327
        %v331 = vadd.f32 %v317, %v325
        %332 = vst [vmem:[%s163 + $0x10] sm:$0xf] %v330
        %vm333 = vcmask 912384
        %334 = vst.msk [vmem:[%s163 + $0x18] sm:$0xf] %vm333, %v331
        %v335 = vld [vmem:[%s163 + $0x10] sm:$0xf0]
        %v336 = vld [vmem:[%s163 + $0x18] sm:$0xf0]
        %v339 = vrot.slane %v254, 4
        %v340 = vrot.slane %v256, 4
        %341 = vrot.lane.b32.xlu0 %v339, 112
        %v342 = vpop.permute.xlu0 %341
        %343 = vrot.lane.b32.xlu0 %v340, 112
        %v344 = vpop.permute.xlu0 %343
        %v345 = vsel %vm326, %v342, %v344
        %v348 = vadd.f32 %v335, %v345
        %v349 = vadd.f32 %v336, %v344
        %350 = vst [vmem:[%s163 + $0x10] sm:$0xf0] %v348
        %vm351 = vcmask 916484
        %352 = vst.msk [vmem:[%s163 + $0x18] sm:$0xf0] %vm351, %v349
        %v353 = vsel %vm293, %v254, 0.0
        %v354 = vsel %vm294, %v256, 0.0
        %v355 = vld [vmem:[%s163] sm:$0xf0]
        %v356 = vld [vmem:[%s163 + $0x8] sm:$0xf0]
        %359 = vrot.lane.b32.xlu0 %v353, 127
        %v360 = vpop.permute.xlu0 %359
        %361 = vrot.lane.b32.xlu0 %v354, 127
        %v362 = vpop.permute.xlu0 %361
        %vm363 = vcmask 1039360
        %v364 = vsel %vm363, %v360, %v362
        %v367 = vadd.f32 %v355, %v364
        %v368 = vadd.f32 %v356, %v362
        %369 = vst [vmem:[%s163] sm:$0xf0] %v367
        %vm370 = vcmask 1039364
        %371 = vst.msk [vmem:[%s163 + $0x8] sm:$0xf0] %vm370, %v368
        %v372 = vld [vmem:[%s163] sm:$0xf]
        %v373 = vld [vmem:[%s163 + $0x8] sm:$0xf]
        %v374 = vadd.f32 %v372, %v260
        %v375 = vadd.f32 %v373, %v262
        %376 = vst [vmem:[%s163] sm:$0xf] %v374
        %377 = vst [vmem:[%s163 + $0x8] sm:$0xf] %v375
        %v378 = vld [vmem:[%s163] sm:$0xf0]
        %v379 = vld [vmem:[%s163 + $0x8] sm:$0xf0]
        %v380 = vadd.f32 %v378, %v260
        %v381 = vadd.f32 %v379, %v262
        %382 = vst [vmem:[%s163] sm:$0xf0] %v380
        %383 = vst [vmem:[%s163 + $0x8] sm:$0xf0] %v381
        %v384 = vsel %vm293, %v264, 0.0
        %v385 = vsel %vm294, %v266, 0.0
        %v386 = vld [vmem:[%s163 + $0x10] sm:$0xf0]
        %v387 = vld [vmem:[%s163 + $0x18] sm:$0xf0]
        %v390 = vrot.slane %v384, 4
        %v391 = vrot.slane %v385, 4
        %392 = vrot.lane.b32.xlu0 %v390, 127
        %v393 = vpop.permute.xlu0 %392
        %394 = vrot.lane.b32.xlu0 %v391, 127
        %v395 = vpop.permute.xlu0 %394
        %v396 = vsel %vm363, %v393, %v395
        %v399 = vadd.f32 %v386, %v396
        %v400 = vadd.f32 %v387, %v395
        %401 = vst [vmem:[%s163 + $0x10] sm:$0xf0] %v399
        %402 = vst.msk [vmem:[%s163 + $0x18] sm:$0xf0] %vm370, %v400
        %v403 = vld [vmem:[%s163 + $0x10] sm:$0xf]
        %v404 = vld [vmem:[%s163 + $0x18] sm:$0xf]
        %v407 = vrot.slane %v264, 4
        %v408 = vrot.slane %v266, 4
        %v411 = vadd.f32 %v403, %v407
        %v412 = vadd.f32 %v404, %v408
        %413 = vst [vmem:[%s163 + $0x10] sm:$0xf] %v411
        %414 = vst [vmem:[%s163 + $0x18] sm:$0xf] %v412
        %v415 = vld [vmem:[%s163 + $0x10] sm:$0xf0]
        %v416 = vld [vmem:[%s163 + $0x18] sm:$0xf0]
        %v419 = vrot.slane %v270, 4
        %v420 = vrot.slane %v272, 4
        %v423 = vadd.f32 %v415, %v419
        %v424 = vadd.f32 %v416, %v420
        %425 = vst [vmem:[%s163 + $0x10] sm:$0xf0] %v423
        %426 = vst [vmem:[%s163 + $0x18] sm:$0xf0] %v424
        %v427 = vld [vmem:[%s163] sm:$0xff]
        %v428 = vld [vmem:[%s163 + $0x8] sm:$0xff]
        %v429 = vld [vmem:[%s163 + $0x10] sm:$0xff]
        %v430 = vld [vmem:[%s163 + $0x18] sm:$0xff]
        %v435 = vcombine.low %v427, %v428
        %v436 = vcombine.high %v427, %v428
        %v437 = vcombine.low %v429, %v430
        %v438 = vcombine.high %v429, %v430
        %v443 = vcombine.high %v435, %v435
        %v444 = vcombine.high %v436, %v436
        %v445 = vcombine.high %v437, %v437
        %v446 = vcombine.high %v438, %v438
        %vm451 = vcmask 1043456
        %v452 = vsel %vm451, %v435, 0.0
        %v453 = vsel %vm451, %v443, 0.0
        %v454 = vadd.f32 %v452, %v453
        %455 = vadd.xlane.f32.xlu0 %v454
        %v456 = vpop.xlane.xlu0 %455
        %v457 = vsel %vm451, %v436, 0.0
        %v458 = vsel %vm451, %v444, 0.0
        %v459 = vadd.f32 %v457, %v458
        %460 = vadd.xlane.f32.xlu0 %v459
        %v461 = vpop.xlane.xlu0 %460
        %v462 = vsel %vm451, %v437, 0.0
        %v463 = vsel %vm451, %v445, 0.0
        %v464 = vadd.f32 %v462, %v463
        %465 = vadd.xlane.f32.xlu0 %v464
        %v466 = vpop.xlane.xlu0 %465
        %v467 = vsel %vm451, %v438, 0.0
        %v468 = vsel %vm451, %v446, 0.0
        %v469 = vadd.f32 %v467, %v468
        %470 = vadd.xlane.f32.xlu0 %v469
        %v471 = vpop.xlane.xlu0 %470
        %v472 = vsel %vm451, %v456, 0.0
        %v473 = vsel %vm451, %v461, 0.0
        %v474 = vadd.f32 %v472, %v473
        %v475 = vsel %vm451, %v466, 0.0
        %v476 = vadd.f32 %v474, %v475
        %v477 = vsel %vm451, %v471, 0.0
        %v478 = vadd.f32 %v476, %v477
        %v479 = vmul.f32 %v478, 0.0009765625
        %v482 = vunpack.c.l.s4 839922192
        %v483 = vunpack.c.0.s8 %v482
        %v484 = vlaneseq
        %v485 = vshrl.u32 %v484, 7
        %v486 = vsub.s32 %v483, %v485
        %v487 = vrot.slane %v479, %v486
        %v489 = vsub.f32 %v435, %v487
        %v490 = vsub.f32 %v436, %v487
        %v491 = vsub.f32 %v437, %v487
        %v492 = vsub.f32 %v438, %v487
        %v493 = vmul.f32 %v489, %v489
        %v494 = vmul.f32 %v490, %v490
        %v495 = vmul.f32 %v491, %v491
        %v496 = vmul.f32 %v492, %v492
        %v501 = vcombine.high %v493, %v493
        %v502 = vcombine.high %v494, %v494
        %v503 = vcombine.high %v495, %v495
        %v504 = vcombine.high %v496, %v496
        %v509 = vsel %vm451, %v493, 0.0
        %v510 = vsel %vm451, %v501, 0.0
        %v511 = vadd.f32 %v509, %v510
        %512 = vadd.xlane.f32.xlu0 %v511
        %v513 = vpop.xlane.xlu0 %512
        %v514 = vsel %vm451, %v494, 0.0
        %v515 = vsel %vm451, %v502, 0.0
        %v516 = vadd.f32 %v514, %v515
        %517 = vadd.xlane.f32.xlu0 %v516
        %v518 = vpop.xlane.xlu0 %517
        %v519 = vsel %vm451, %v495, 0.0
        %v520 = vsel %vm451, %v503, 0.0
        %v521 = vadd.f32 %v519, %v520
        %522 = vadd.xlane.f32.xlu0 %v521
        %v523 = vpop.xlane.xlu0 %522
        %v524 = vsel %vm451, %v496, 0.0
        %v525 = vsel %vm451, %v504, 0.0
        %v526 = vadd.f32 %v524, %v525
        %527 = vadd.xlane.f32.xlu0 %v526
        %v528 = vpop.xlane.xlu0 %527
        %v529 = vsel %vm451, %v513, 0.0
        %v530 = vsel %vm451, %v518, 0.0
        %v531 = vadd.f32 %v529, %v530
        %v532 = vsel %vm451, %v523, 0.0
        %v533 = vadd.f32 %v531, %v532
        %v534 = vsel %vm451, %v528, 0.0
        %v535 = vadd.f32 %v533, %v534
        %v536 = vmul.f32 %v535, 0.0009765625
        %v537 = vadd.f32 %v536, 1e-05
        %v538 = vrsqrt.pop %v537
        %v541 = vunpack.c.l.s4 839922192
        %v542 = vunpack.c.0.s8 %v541
        %v543 = vlaneseq
        %v544 = vshrl.u32 %v543, 7
        %v545 = vsub.s32 %v542, %v544
        %v546 = vrot.slane %v538, %v545
        %v548 = vmul.f32 %v489, %v546
        %v549 = vmul.f32 %v490, %v546
        %v550 = vmul.f32 %v491, %v546
        %v551 = vmul.f32 %v492, %v546
        %v552 = vmax.f32 %v548, 0.0
        %v553 = vmax.f32 %v549, 0.0
        %v554 = vmax.f32 %v550, 0.0
        %v555 = vmax.f32 %v551, 0.0
        %v560 = vcombine.low %v552, %v553
        %v561 = vcombine.high %v552, %v553
        %v562 = vcombine.low %v554, %v555
        %v563 = vcombine.high %v554, %v555
        %568 = vst [vmem:[%s163] sm:$0xff] %v560
        %569 = vst [vmem:[%s163 + $0x8] sm:$0xff] %v561
        %570 = vst [vmem:[%s163 + $0x10] sm:$0xff] %v562
        %571 = vst [vmem:[%s163 + $0x18] sm:$0xff] %v563
        %s572 = sand.u32 %s93, 1
        %s573 = scalar_lea.sflag [#allocation3], %s572
        %s574 = sand.u32 %s93, 1
        %s575 = smul.addr %s574, 32
        %s576 = scalar_lea.vmem [#allocation2], %s575
        // Predicated region
        $region33: #{tpu_custom_call.1} parent=31 // pred_check
          %p577 = pneg %p103
        $region34: #{tpu_custom_call.1} parent=31 // pred_check_branch
          %579 = sbr.rel (%p577) target = $region36
        $region35: #{tpu_custom_call.1} parent=31 // pred_region
          %s581 = ssub.s32 512, 512
          %582 = vsyncadd %s573, %s581
          %s583 = smul.addr %s17, 4
          %s584 = smul.addr %s583, 128
          %s585 = scalar_lea.hbm %s3, %s584
          %s586 = sshll.u32 %s576, 4
          %s587 = int_to_ptr.vmem [resolvable:$true] %s586
          %592 = dma.vmem_to_hbm [thread:$0]  %s587, 512, %s585, %s573, 256, 256, 16
        $region36: #{tpu_custom_call.1} parent=31 // pred_fallthru
          _
      $region32: #{tpu_custom_call.1} parent=5 // pred_fallthru
        _
      %p593 = scmp.le.s32.totalorder 2, %s12
      // Predicated region
      $region37: #{tpu_custom_call.1} parent=5 // pred_check
        %p594 = pneg %p593
      $region38: #{tpu_custom_call.1} parent=5 // pred_check_branch
        %596 = sbr.rel (%p594) target = $region40
      $region39: #{tpu_custom_call.1} parent=5 // pred_region
        %s597 = ssub.s32 %s12, 2
        // Predicated region
        $region41: #{tpu_custom_call.1} parent=39 // pred_check
          %p598 = pneg %p109
        $region42: #{tpu_custom_call.1} parent=39 // pred_check_branch
          %600 = sbr.rel (%p598) target = $region44
        $region43: #{tpu_custom_call.1} parent=39 // pred_region
          %s601 = sand.u32 %s94, 1
          %s602 = scalar_lea.sflag [#allocation3], %s601
          %s603 = sand.u32 %s94, 1
          %s604 = smul.addr %s603, 32
          %s605 = scalar_lea.vmem [#allocation2], %s604
          %606 = dma.done %s602, 512
        $region44: #{tpu_custom_call.1} parent=39 // pred_fallthru
          _
      $region40: #{tpu_custom_call.1} parent=5 // pred_fallthru
        _
    $region6: #{tpu_custom_call.1} parent=1 // loop_footer
      %s16 = sadd.s32 1, %s12
    $region7: #{tpu_custom_call.1} parent=1 // loop_footer_branch
      %11 = sbr.rel target = $region3
    $region8: #{tpu_custom_call.1} parent=1 // loop_exit
      _
    %607 = vsyncpa [#allocation3], 1
    %s608 = scalar_lea.sflag [#allocation3], 1
    %609 = vsyncpa %s608, 1

</llo_original>
